<compile_context>
chip_gen: v6e
topology: v6e:2x2x1
jax: 0.10.0
libtpu: 0.0.40
codegen_flags: <defaults>
</compile_context>

<pallas_src>
import functools

import jax
import jax.numpy as jnp
import numpy as np
from jax.experimental import pallas as pl
from jax.experimental.pallas import tpu as pltpu


def _round_up(x, m):
    return ((x + m - 1) // m) * m


def _post_prob_scale_kernel(points_ref, coods_ref, out_ref, *, c_size):
    """One grid step == one tile of TN points.

    points_ref : (TN, 3) float32   columns = [x, y, s]
    coods_ref  : (5, L)  float32   rows = [cx, cy, cs, cx*cx, cy*cy] per
                                   flattened output index (L = S*C*C)
    out_ref    : (TN, L) float32   flattened [scale, y_bin, x_bin] distances
    """
    x = points_ref[:, 0:1]          # (TN, 1)
    y = points_ref[:, 1:2]          # (TN, 1)
    s = points_ref[:, 2:3]          # (TN, 1)

    cx = coods_ref[0:1, :]          # (1, L)
    cy = coods_ref[1:2, :]          # (1, L)
    cs = coods_ref[2:3, :]          # (1, L)
    cx2 = coods_ref[3:4, :]         # (1, L)  == cx * cx (precomputed)
    cy2 = coods_ref[4:5, :]         # (1, L)  == cy * cy (precomputed)

    c2 = float(c_size) ** 2

    # Same arithmetic / association order as the PyTorch reference.
    x_dis = -2.0 * x * cx + x * x + cx2          # (TN, L)
    y_dis = -2.0 * y * cy + y * y + cy2          # (TN, L)
    spatial = (y_dis + x_dis) / c2               # (TN, L)
    s_dis = jnp.log((cs - s) ** 2 + 1e-5) / c2   # (TN, L)   (EUP log)
    dis = spatial + s_dis
    out_ref[...] = jnp.sqrt(jnp.maximum(dis, 0.0))


def post_prob_scale(points, scale_list, c_size, stride, *, tn=512):
    """Pallas forward of Post_Prob_Scale: points (N, 3) -> (N, S*C*C)."""
    assert c_size % stride == 0
    N = points.shape[0]
    C = c_size // stride
    scales = sorted(float(v) for v in scale_list)
    S = len(scales)
    L = S * C * C

    # Flattened coordinate constants (all float32, same precision as kernel):
    # index l -> (si, yi, xi) with si = l // (C*C), yi = (l // C) % C, xi = l % C
    cood = (np.arange(0, c_size, stride, dtype=np.float32)
            + np.float32(stride // 2))                                # (C,)
    cs_np = np.repeat(np.asarray(scales, dtype=np.float32), C * C)    # (L,)
    cy_np = np.tile(np.repeat(cood, C), S)                            # (L,)
    cx_np = np.tile(cood, S * C)                                      # (L,)
    coods = jnp.asarray(
        np.stack([cx_np, cy_np, cs_np, cx_np * cx_np, cy_np * cy_np], axis=0)
    )                                                                 # (5, L)

    # Point-tile size: multiple of 8, no bigger than needed, and capped so the
    # double-buffered (TN, L) f32 output block (+ inputs / intermediates) stays
    # well inside the 32 MiB scoped-VMEM default on every TPU generation.
    tn = min(int(tn), _round_up(N, 8))
    vmem_cap = max(8, ((2 * 1024 * 1024) // (4 * L)) // 8 * 8)   # ~2 MiB / block
    tn = max(8, min(tn, vmem_cap))
    n_pad = _round_up(N, tn)

    pts = points.astype(jnp.float32)
    if n_pad != N:
        pts = jnp.pad(pts, ((0, n_pad - N), (0, 0)))

    out = pl.pallas_call(
        functools.partial(_post_prob_scale_kernel, c_size=c_size),
        out_shape=jax.ShapeDtypeStruct((n_pad, L), jnp.float32),
        grid=(n_pad // tn,),
        in_specs=[
            pl.BlockSpec((tn, 3), lambda i: (i, 0)),   # points tile
            pl.BlockSpec((5, L), lambda i: (0, 0)),    # constant coord table (reused)
        ],
        out_specs=pl.BlockSpec((tn, L), lambda i: (i, 0)),
        compiler_params=pltpu.CompilerParams(
            dimension_semantics=("parallel",)),
    )(pts, coods)

    return out if n_pad == N else out[:N]


def post_prob_scale_ref(points, scale_list, c_size, stride):
    """Pure-JAX mirror of the PyTorch forward (for verification)."""
    cood_s = jnp.asarray(sorted(scale_list), dtype=jnp.float32)[None, :]   # (1, S)
    cood = (jnp.arange(0, c_size, stride, dtype=jnp.float32)
            + float(stride // 2))[None, :]                                 # (1, C)
    x = points[:, 0:1]
    y = points[:, 1:2]
    s = points[:, 2:3]
    x_dis = -2.0 * (x @ cood) + x * x + cood * cood
    y_dis = -2.0 * (y @ cood) + y * y + cood * cood
    s_dis = jnp.log((cood_s - s) ** 2 + 1e-5) / c_size ** 2
    dis = y_dis[:, :, None] + x_dis[:, None, :]
    dis = dis.reshape(dis.shape[0], -1) / c_size ** 2
    dis = dis[:, None, :] + s_dis[:, :, None]
    dis = dis.reshape(dis.shape[0], -1)
    return jnp.sqrt(jax.nn.relu(dis))


if __name__ == "__main__":
    # Deterministic, module-consistent config (no learnable weights in __init__).
    scale_list = [2.0, 0.5, 1.0]     # S = 3 (sorted inside)
    c_size = 16
    stride = 4                       # C = c_size // stride = 4
    N = 8                            # number of points

    key = jax.random.PRNGKey(0)
    kx, ky, ks = jax.random.split(key, 3)
    xs = jax.random.uniform(kx, (N, 1), dtype=jnp.float32, minval=0.0, maxval=float(c_size))
    ys = jax.random.uniform(ky, (N, 1), dtype=jnp.float32, minval=0.0, maxval=float(c_size))
    ss = jax.random.uniform(ks, (N, 1), dtype=jnp.float32, minval=0.1, maxval=3.0)
    points = jnp.concatenate([xs, ys, ss], axis=1)       # (N, 3): [x, y, s]

    out = post_prob_scale(points, scale_list, c_size, stride)
    out = jax.block_until_ready(out)

    ref = jax.block_until_ready(post_prob_scale_ref(points, scale_list, c_size, stride))
    np.testing.assert_allclose(np.asarray(out), np.asarray(ref), rtol=1e-5, atol=1e-5)

    print("KERNEL_OK")
</pallas_src>

<mosaic_0001>
module attributes {stable_mosaic.version = 11 : i64} {
  func.func @_post_prob_scale_kernel(%arg0: i32, %arg1: memref<8x3xf32, #tpu.memory_space<vmem>>, %arg2: memref<5x48xf32, #tpu.memory_space<vmem>>, %arg3: memref<8x48xf32, #tpu.memory_space<vmem>>) attributes {dimension_semantics = [#tpu.dimension_semantics<parallel>], iteration_bounds = array<i64: 1>, scalar_prefetch = 0 : i64, scratch_operands = 0 : i64, tpu.core_type = #tpu.core_type<tc>, window_params = [{transform_indices = @transform_0, window_bounds = array<i64: 8, 3>}, {pipeline_mode = #tpu.pipeline_mode<synchronous>, transform_indices = @transform_1, window_bounds = array<i64: 5, 48>}, {transform_indices = @transform_2, window_bounds = array<i64: 8, 48>}]} {
    %c0 = arith.constant 0 : index
    %c0_0 = arith.constant 0 : index
    %0 = vector.load %arg1[%c0, %c0_0] : memref<8x3xf32, #tpu.memory_space<vmem>>, vector<8x1xf32>
    %c0_1 = arith.constant 0 : index
    %c1 = arith.constant 1 : index
    %1 = vector.load %arg1[%c0_1, %c1] : memref<8x3xf32, #tpu.memory_space<vmem>>, vector<8x1xf32>
    %c0_2 = arith.constant 0 : index
    %c2 = arith.constant 2 : index
    %2 = vector.load %arg1[%c0_2, %c2] : memref<8x3xf32, #tpu.memory_space<vmem>>, vector<8x1xf32>
    %c0_3 = arith.constant 0 : index
    %c0_4 = arith.constant 0 : index
    %3 = vector.load %arg2[%c0_3, %c0_4] : memref<5x48xf32, #tpu.memory_space<vmem>>, vector<1x48xf32>
    %c1_5 = arith.constant 1 : index
    %c0_6 = arith.constant 0 : index
    %4 = vector.load %arg2[%c1_5, %c0_6] : memref<5x48xf32, #tpu.memory_space<vmem>>, vector<1x48xf32>
    %c2_7 = arith.constant 2 : index
    %c0_8 = arith.constant 0 : index
    %5 = vector.load %arg2[%c2_7, %c0_8] : memref<5x48xf32, #tpu.memory_space<vmem>>, vector<1x48xf32>
    %c3 = arith.constant 3 : index
    %c0_9 = arith.constant 0 : index
    %6 = vector.load %arg2[%c3, %c0_9] : memref<5x48xf32, #tpu.memory_space<vmem>>, vector<1x48xf32>
    %c4 = arith.constant 4 : index
    %c0_10 = arith.constant 0 : index
    %7 = vector.load %arg2[%c4, %c0_10] : memref<5x48xf32, #tpu.memory_space<vmem>>, vector<1x48xf32>
    %cst = arith.constant -2.000000e+00 : f32
    %8 = vector.broadcast %cst : f32 to vector<8x1xf32>
    %9 = arith.mulf %8, %0 : vector<8x1xf32>
    %10 = vector.broadcast %9 : vector<8x1xf32> to vector<8x48xf32>
    %11 = vector.broadcast %3 : vector<1x48xf32> to vector<8x48xf32>
    %12 = arith.mulf %10, %11 : vector<8x48xf32>
    %13 = arith.mulf %0, %0 : vector<8x1xf32>
    %14 = vector.broadcast %13 : vector<8x1xf32> to vector<8x48xf32>
    %15 = arith.addf %12, %14 : vector<8x48xf32>
    %16 = vector.broadcast %6 : vector<1x48xf32> to vector<8x48xf32>
    %17 = arith.addf %15, %16 : vector<8x48xf32>
    %cst_11 = arith.constant -2.000000e+00 : f32
    %18 = vector.broadcast %cst_11 : f32 to vector<8x1xf32>
    %19 = arith.mulf %18, %1 : vector<8x1xf32>
    %20 = vector.broadcast %19 : vector<8x1xf32> to vector<8x48xf32>
    %21 = vector.broadcast %4 : vector<1x48xf32> to vector<8x48xf32>
    %22 = arith.mulf %20, %21 : vector<8x48xf32>
    %23 = arith.mulf %1, %1 : vector<8x1xf32>
    %24 = vector.broadcast %23 : vector<8x1xf32> to vector<8x48xf32>
    %25 = arith.addf %22, %24 : vector<8x48xf32>
    %26 = vector.broadcast %7 : vector<1x48xf32> to vector<8x48xf32>
    %27 = arith.addf %25, %26 : vector<8x48xf32>
    %28 = arith.addf %27, %17 : vector<8x48xf32>
    %cst_12 = arith.constant 2.560000e+02 : f32
    %29 = vector.broadcast %cst_12 : f32 to vector<8x48xf32>
    %30 = arith.divf %28, %29 : vector<8x48xf32>
    %31 = vector.broadcast %5 : vector<1x48xf32> to vector<8x48xf32>
    %32 = vector.broadcast %2 : vector<8x1xf32> to vector<8x48xf32>
    %33 = arith.subf %31, %32 : vector<8x48xf32>
    %34 = arith.mulf %33, %33 : vector<8x48xf32>
    %cst_13 = arith.constant 9.99999974E-6 : f32
    %35 = vector.broadcast %cst_13 : f32 to vector<8x48xf32>
    %36 = arith.addf %34, %35 : vector<8x48xf32>
    %37 = math.log %36 : vector<8x48xf32>
    %cst_14 = arith.constant 2.560000e+02 : f32
    %38 = vector.broadcast %cst_14 : f32 to vector<8x48xf32>
    %39 = arith.divf %37, %38 : vector<8x48xf32>
    %40 = arith.addf %30, %39 : vector<8x48xf32>
    %cst_15 = arith.constant 0.000000e+00 : f32
    %41 = vector.broadcast %cst_15 : f32 to vector<8x48xf32>
    %42 = arith.maximumf %40, %41 : vector<8x48xf32>
    %43 = math.sqrt %42 : vector<8x48xf32>
    %c0_16 = arith.constant 0 : index
    %c0_17 = arith.constant 0 : index
    %44 = vector.load %arg3[%c0_16, %c0_17] : memref<8x48xf32, #tpu.memory_space<vmem>>, vector<8x48xf32>
    tpu.vector_store %arg3[%c0_16, %c0_17], %43 {strides = array<i32>} : memref<8x48xf32, #tpu.memory_space<vmem>>, vector<8x48xf32>,
    return
  }
  func.func @transform_0(%arg0: i32) -> (i32, i32) {
    %c0_i32 = arith.constant 0 : i32
    %c0_i32_0 = arith.constant 0 : i32
    return %arg0, %c0_i32 : i32, i32
  }
  func.func @transform_1(%arg0: i32) -> (i32, i32) {
    %c0_i32 = arith.constant 0 : i32
    %c0_i32_0 = arith.constant 0 : i32
    %c0_i32_1 = arith.constant 0 : i32
    return %c0_i32, %c0_i32_0 : i32, i32
  }
  func.func @transform_2(%arg0: i32) -> (i32, i32) {
    %c0_i32 = arith.constant 0 : i32
    %c0_i32_0 = arith.constant 0 : i32
    return %arg0, %c0_i32 : i32, i32
  }
}

</mosaic_0001>

<llo_original>
// kernel: tpu_custom_call.1
$region0: #{tpu_custom_call.1}
  #allocation0 [shape = 'u32[]', space=smem, size = 0x4, offset = 0x4, fixed_abs, tag = 'smem constant byte address 0x4 - core index']
  #allocation1 [shape = 'u32[144,128]{1,0:T(1,128)}', space=vmem, size = 0x12000, scoped, tag = 'internal scratch']
  %s0 = inlined_call_operand.vmem [shape: f32[8,3], index: 0, kind: input, shape index: {}]
  %s1 = inlined_call_operand.vmem [shape: f32[5,48], index: 1, kind: input, shape index: {}]
  %s2 = inlined_call_operand.hbm [shape: f32[8,48], index: 2, kind: output, shape index: {}]
  %s3 = sld [smem:[#allocation0]]
  $region18: #{tpu_custom_call.1} parent=0
    _
  %s5 = ssub.s32 1, %s3
  %s6 = scalar_select 0, %s5, %s3
  $region1: #{tpu_custom_call.1} parent=0
    #allocation2 [shape = 'u8[4096]{0}', space=vmem, size = 0x1000, scoped, tag = 'output window, operand 0, single buffered']
    #allocation3 [shape = 's32[1]{0}', space=sflag, size = 0x4, scoped, tag = 'scoped memory for tpu_custom_call.1']
    %7 = vsyncpa [#allocation3], 0
    // Predicated region
    $region2: #{tpu_custom_call.1} parent=1 // pred_check
      _
    $region3: #{tpu_custom_call.1} parent=1 // pred_check_branch
      %9 = sbr.rel (0) target = $region5
    $region4: #{tpu_custom_call.1} parent=1 // pred_region
      _
    $region5: #{tpu_custom_call.1} parent=1 // pred_fallthru
      _
    // Predicated region
    $region6: #{tpu_custom_call.1} parent=1 // pred_check
      _
    $region7: #{tpu_custom_call.1} parent=1 // pred_check_branch
      %11 = sbr.rel (0) target = $region9
    $region8: #{tpu_custom_call.1} parent=1 // pred_region
      _
    $region9: #{tpu_custom_call.1} parent=1 // pred_fallthru
      _
    %v12 = vld [vmem:[%s0] sm:$0xff]
    %v13 = vld [vmem:[%s1] sm:$0x1]
    %v14 = vld [vmem:[%s1 + $0x1] sm:$0x1]
    %v15 = vld [vmem:[%s1 + $0x2] sm:$0x1]
    %v16 = vld [vmem:[%s1 + $0x3] sm:$0x1]
    %v17 = vld [vmem:[%s1 + $0x4] sm:$0x1]
    %v18 = vmul.f32 %v12, -2.0
    %20 = vset.pattern.permute.xlu0 0
    %21 = vperm.xlu0 %20, %v18
    %v22 = vpop.permute.xlu0 %21
    %v24 = vlaneseq
    %v25 = vshrl.u32 %v24, 7
    %v26 = vsub.s32 0, %v25
    %v27 = vrot.slane %v13, %v26
    %v28 = vmul.f32 %v22, %v27
    %v29 = vmul.f32 %v12, %v12
    %31 = vset.pattern.permute.xlu0 0
    %32 = vperm.xlu0 %31, %v29
    %v33 = vpop.permute.xlu0 %32
    %v35 = vadd.f32 %v28, %v33
    %v36 = vlaneseq
    %v37 = vshrl.u32 %v36, 7
    %v38 = vsub.s32 0, %v37
    %v39 = vrot.slane %v16, %v38
    %v40 = vadd.f32 %v35, %v39
    %41 = vset.pattern.permute.xlu0 1
    %42 = vperm.xlu0 %41, %v18
    %v43 = vpop.permute.xlu0 %42
    %v45 = vlaneseq
    %v46 = vshrl.u32 %v45, 7
    %v47 = vsub.s32 0, %v46
    %v48 = vrot.slane %v14, %v47
    %v49 = vmul.f32 %v43, %v48
    %50 = vset.pattern.permute.xlu0 1
    %51 = vperm.xlu0 %50, %v29
    %v52 = vpop.permute.xlu0 %51
    %v54 = vadd.f32 %v49, %v52
    %v55 = vlaneseq
    %v56 = vshrl.u32 %v55, 7
    %v57 = vsub.s32 0, %v56
    %v58 = vrot.slane %v17, %v57
    %v59 = vadd.f32 %v54, %v58
    %v60 = vadd.f32 %v59, %v40
    %v61 = vrcp.pop 256.0
    %v62 = vmul.f32 %v60, %v61
    %v63 = vlaneseq
    %v64 = vshrl.u32 %v63, 7
    %v65 = vsub.s32 0, %v64
    %v66 = vrot.slane %v15, %v65
    %68 = vset.pattern.permute.xlu0 2
    %69 = vperm.xlu0 %68, %v12
    %v70 = vpop.permute.xlu0 %69
    %v72 = vsub.f32 %v66, %v70
    %v73 = vmul.f32 %v72, %v72
    %v74 = vadd.f32 %v73, 1e-05
    %v75 = vlog2.pop %v74
    %v76 = vmul.f32 %v75, 0.6931472
    %v77 = vmul.f32 %v76, %v61
    %v78 = vadd.f32 %v62, %v77
    %v79 = vmax.f32 %v78, 0.0
    %v80 = vrsqrt.pop %v79
    %v81 = vmul.f32 %v79, %v80
    %vm82 = vcmp.eq.f32.partialorder %v79, inf
    %v83 = vsel %vm82, %v79, %v81
    %vm84 = vcmp.eq.f32.partialorder %v79, 0.0
    %v85 = vand.u32 %v79, 2147483648
    %v86 = vsel %vm84, %v85, %v83
    %vm87 = vcmask 392192
    %88 = vst.msk [vmem:[#allocation2] sm:$0xff] %vm87, %v86
    // Predicated region
    $region10: #{tpu_custom_call.1} parent=1 // pred_check
      _
    $region11: #{tpu_custom_call.1} parent=1 // pred_check_branch
      %90 = sbr.rel (0) target = $region13
    $region12: #{tpu_custom_call.1} parent=1 // pred_region
      %s92 = ssub.s32 128, 128
      %93 = vsyncadd [#allocation3], %s92
      %s95 = sshll.u32 [#allocation2], 4
      %s96 = int_to_ptr.vmem [resolvable:$true] %s95
      %98 = dma.vmem_to_hbm [thread:$0]  %s96, 128, %s2, [#allocation3]
    $region13: #{tpu_custom_call.1} parent=1 // pred_fallthru
      _
    // Predicated region
    $region14: #{tpu_custom_call.1} parent=1 // pred_check
      _
    $region15: #{tpu_custom_call.1} parent=1 // pred_check_branch
      %100 = sbr.rel (0) target = $region17
    $region16: #{tpu_custom_call.1} parent=1 // pred_region
      %101 = dma.done [#allocation3], 128
    $region17: #{tpu_custom_call.1} parent=1 // pred_fallthru
      _
    %102 = vsyncpa [#allocation3], 1

</llo_original>
